<compile_context>
chip_gen: v7x
topology: tpu7x:2x2x1
jax: 0.10.0
libtpu: 0.0.40
codegen_flags: <defaults>
</compile_context>

<pallas_src>
import math

import jax
import jax.numpy as jnp
from jax.experimental import pallas as pl
from jax.experimental.pallas import tpu as pltpu


def _regressor_kernel(x_ref, w1_ref, w2_ref, w3_ref, o_ref):
    """One (image, spatial-tile) step: y = W3 @ relu(W2 @ relu(W1 @ x)).

    Single-pass bf16 MXU matmuls with f32 accumulation; spatial (T) stays on the
    128-lane axis so both the input load and the output store are lane-dense.
    """
    x = x_ref[0].astype(jnp.bfloat16)                                 # (Cin, T)
    h = jnp.dot(w1_ref[...], x, preferred_element_type=jnp.float32)   # (Cmid, T)
    h = jnp.maximum(h, 0.0).astype(jnp.bfloat16)
    h = jnp.dot(w2_ref[...], h, preferred_element_type=jnp.float32)   # (Cmid, T)
    h = jnp.maximum(h, 0.0).astype(jnp.bfloat16)
    y = jnp.dot(w3_ref[...], h, preferred_element_type=jnp.float32)   # (Cout, T)
    o_ref[...] = y[None, :, :].astype(o_ref.dtype)


def _pick_hw_tile(hw, n, cin, cmid, cout, x_bytes, o_bytes,
                  vmem_budget_bytes=10 * 1024 * 1024, max_tile=32768):
    """Pick the spatial (lane) tile: as large as the VMEM budget allows, 128-aligned.

    per-lane VMEM = double-buffered in/out tiles + f32 dot results + bf16 casts.
    The 10 MiB budget stays below every generation's default scoped VMEM
    (16 MiB v5e, 32 MiB v6e/v7x) so full double-buffering is preserved, and well
    below v7x's 64 MiB physical VMEM.
    """
    per_lane = (2 * cin * x_bytes          # input tile, double-buffered
                + 2 * cout * o_bytes       # output tile, double-buffered
                + cin * 2                  # bf16 copy of x
                + 2 * cmid * (4 + 2))      # f32 dot results + bf16 relu casts
    t = min(vmem_budget_bytes // max(per_lane, 1), max_tile)
    if n == 1:
        # v7x has 2 TensorCores sharded over the parallel grid axes: keep >= 2
        # spatial blocks for single-image inputs so neither core idles.
        t = min(t, max(pl.cdiv(hw, 2), 128))
    if hw <= t:
        return hw                          # full extent is always a legal block
    return max((t // 128) * 128, 128)      # 128-multiple tile; ragged last block OK


def regressor4vid_forward(x_nchw, w1_oihw, w2_oihw, w3_oihw, soft_plus_param, *, eps):
    """Regressor4VID.forward -> (pred_mean (N,Cout,H,W), pred_var (1,Cout,1,1))."""
    N, Cin, H, W = x_nchw.shape
    Cmid = w1_oihw.shape[0]
    Cout = w3_oihw.shape[0]
    HW = H * W
    out_dtype = x_nchw.dtype

    # 1x1 conv weights collapse to plain channel-mixing matrices; bf16 keeps the
    # MXU in single-pass mode (f32 accumulation via preferred_element_type).
    w1 = w1_oihw.reshape(Cmid, Cin).astype(jnp.bfloat16)
    w2 = w2_oihw.reshape(Cmid, Cmid).astype(jnp.bfloat16)
    w3 = w3_oihw.reshape(Cout, Cmid).astype(jnp.bfloat16)

    # NCHW already has channels-on-sublane / HW-on-lane: flattening spatial is a
    # free reshape, and x keeps its native dtype (no f32 upcast in HBM).
    x = x_nchw.reshape(N, Cin, HW)

    t_hw = _pick_hw_tile(HW, N, Cin, Cmid, Cout,
                         x.dtype.itemsize, jnp.dtype(out_dtype).itemsize)
    grid = (N, pl.cdiv(HW, t_hw))

    pred_mean = pl.pallas_call(
        _regressor_kernel,
        out_shape=jax.ShapeDtypeStruct((N, Cout, HW), out_dtype),
        grid_spec=pltpu.PrefetchScalarGridSpec(
            num_scalar_prefetch=0,
            grid=grid,
            in_specs=[
                pl.BlockSpec((1, Cin, t_hw), lambda n, s: (n, 0, s)),
                # Constant index maps -> tiny weights stay resident in VMEM.
                pl.BlockSpec((Cmid, Cin), lambda n, s: (0, 0)),
                pl.BlockSpec((Cmid, Cmid), lambda n, s: (0, 0)),
                pl.BlockSpec((Cout, Cmid), lambda n, s: (0, 0)),
            ],
            out_specs=pl.BlockSpec((1, Cout, t_hw), lambda n, s: (n, 0, s)),
        ),
        compiler_params=pltpu.CompilerParams(
            dimension_semantics=("parallel", "parallel"),
            vmem_limit_bytes=32 * 1024 * 1024),
    )(x, w1, w2, w3).reshape(N, Cout, H, W)

    # pred_var is parameter-only (input-independent): a dedicated kernel launch is
    # pure fixed overhead, so it stays in plain JAX.  jax.nn.softplus is the
    # overflow-safe form of log(1 + exp(p)).
    pred_var = jax.nn.softplus(soft_plus_param.astype(jnp.float32)) + eps
    pred_var = pred_var.reshape(1, Cout, 1, 1)

    return pred_mean, pred_var


def _reference(x, w1_oihw, w2_oihw, w3_oihw, soft_plus_param, eps):
    """Plain-JAX (full f32) reference of Regressor4VID.forward."""
    def conv1x1(v, w):
        return jnp.einsum("oi,nihw->nohw", w[:, :, 0, 0], v,
                          precision=jax.lax.Precision.HIGHEST)
    h = jnp.maximum(conv1x1(x, w1_oihw), 0.0)
    h = jnp.maximum(conv1x1(h, w2_oihw), 0.0)
    pred_mean = conv1x1(h, w3_oihw)
    pred_var = (jnp.log1p(jnp.exp(soft_plus_param)) + eps).reshape(1, -1, 1, 1)
    return pred_mean, pred_var


if __name__ == "__main__":
    # Small shapes consistent with the module: in=8, mid=32, out=16, 16x16 map, batch 2.
    N, Cin, Cmid, Cout, H, W = 2, 8, 32, 16, 16, 16
    eps = 1e-5
    init_pred_var = 5.0

    key = jax.random.PRNGKey(0)
    k_x, k_w1, k_w2, k_w3 = jax.random.split(key, 4)

    x = jax.random.normal(k_x, (N, Cin, H, W), jnp.float32)
    # Bias-free 1x1 conv weights in PyTorch OIHW layout.
    w1 = 0.2 * jax.random.normal(k_w1, (Cmid, Cin, 1, 1), jnp.float32)
    w2 = 0.2 * jax.random.normal(k_w2, (Cmid, Cmid, 1, 1), jnp.float32)
    w3 = 0.2 * jax.random.normal(k_w3, (Cout, Cmid, 1, 1), jnp.float32)
    # soft_plus_param initialized exactly as the module does.
    sp_init = math.log(math.exp(init_pred_var - eps) - 1.0)
    soft_plus_param = jnp.full((Cout,), sp_init, jnp.float32)

    pred_mean, pred_var = regressor4vid_forward(
        x, w1, w2, w3, soft_plus_param, eps=eps)
    pred_mean = jax.block_until_ready(pred_mean)
    pred_var = jax.block_until_ready(pred_var)

    ref_mean, ref_var = _reference(x, w1, w2, w3, soft_plus_param, eps)

    assert pred_mean.shape == (N, Cout, H, W)
    assert pred_var.shape == (1, Cout, 1, 1)
    # bf16 MXU compute vs f32 reference: deliberate precision trade (see review),
    # so the mean comparison uses a correspondingly looser tolerance.
    assert jnp.allclose(pred_mean, ref_mean, rtol=2e-2, atol=2e-2)
    assert jnp.allclose(pred_var, ref_var, rtol=1e-5, atol=1e-4)

    print("KERNEL_OK")
</pallas_src>

<mosaic_0001>
module attributes {stable_mosaic.version = 11 : i64} {
  func.func @_regressor_kernel(%arg0: i32, %arg1: i32, %arg2: memref<1x8x256xf32, #tpu.memory_space<vmem>>, %arg3: memref<32x8xbf16, #tpu.memory_space<vmem>>, %arg4: memref<32x32xbf16, #tpu.memory_space<vmem>>, %arg5: memref<16x32xbf16, #tpu.memory_space<vmem>>, %arg6: memref<1x16x256xf32, #tpu.memory_space<vmem>>) attributes {dimension_semantics = [#tpu.dimension_semantics<parallel>, #tpu.dimension_semantics<parallel>], iteration_bounds = array<i64: 2, 1>, scalar_prefetch = 0 : i64, scratch_operands = 0 : i64, tpu.core_type = #tpu.core_type<tc>, window_params = [{transform_indices = @transform_0, window_bounds = array<i64: 1, 8, 256>}, {pipeline_mode = #tpu.pipeline_mode<synchronous>, transform_indices = @transform_1, window_bounds = array<i64: 32, 8>}, {pipeline_mode = #tpu.pipeline_mode<synchronous>, transform_indices = @transform_2, window_bounds = array<i64: 32, 32>}, {pipeline_mode = #tpu.pipeline_mode<synchronous>, transform_indices = @transform_3, window_bounds = array<i64: 16, 32>}, {transform_indices = @transform_4, window_bounds = array<i64: 1, 16, 256>}]} {
    %c0 = arith.constant 0 : index
    %c0_0 = arith.constant 0 : index
    %c0_1 = arith.constant 0 : index
    %0 = vector.load %arg2[%c0, %c0_0, %c0_1] : memref<1x8x256xf32, #tpu.memory_space<vmem>>, vector<1x8x256xf32>
    %1 = vector.shape_cast %0 : vector<1x8x256xf32> to vector<8x256xf32>
    %2 = arith.truncf %1 : vector<8x256xf32> to vector<8x256xbf16>
    %c0_2 = arith.constant 0 : index
    %c0_3 = arith.constant 0 : index
    %3 = vector.load %arg3[%c0_2, %c0_3] : memref<32x8xbf16, #tpu.memory_space<vmem>>, vector<32x8xbf16>
    %cst = arith.constant dense<0.000000e+00> : vector<32x256xf32>
    %4 = tpu.matmul %3, %2, %cst {dimension_numbers = #tpu.dot_dimension_numbers<[1], [0], [0], [1], [0, 0, 1, 1], [], []>} : vector<32x8xbf16>, vector<8x256xbf16>, vector<32x256xf32> -> vector<32x256xf32>
    %cst_4 = arith.constant 0.000000e+00 : f32
    %5 = vector.broadcast %cst_4 : f32 to vector<32x256xf32>
    %6 = arith.maximumf %4, %5 : vector<32x256xf32>
    %7 = arith.truncf %6 : vector<32x256xf32> to vector<32x256xbf16>
    %c0_5 = arith.constant 0 : index
    %c0_6 = arith.constant 0 : index
    %8 = vector.load %arg4[%c0_5, %c0_6] : memref<32x32xbf16, #tpu.memory_space<vmem>>, vector<32x32xbf16>
    %cst_7 = arith.constant dense<0.000000e+00> : vector<32x256xf32>
    %9 = tpu.matmul %8, %7, %cst_7 {dimension_numbers = #tpu.dot_dimension_numbers<[1], [0], [0], [1], [0, 0, 1, 1], [], []>} : vector<32x32xbf16>, vector<32x256xbf16>, vector<32x256xf32> -> vector<32x256xf32>
    %cst_8 = arith.constant 0.000000e+00 : f32
    %10 = vector.broadcast %cst_8 : f32 to vector<32x256xf32>
    %11 = arith.maximumf %9, %10 : vector<32x256xf32>
    %12 = arith.truncf %11 : vector<32x256xf32> to vector<32x256xbf16>
    %c0_9 = arith.constant 0 : index
    %c0_10 = arith.constant 0 : index
    %13 = vector.load %arg5[%c0_9, %c0_10] : memref<16x32xbf16, #tpu.memory_space<vmem>>, vector<16x32xbf16>
    %cst_11 = arith.constant dense<0.000000e+00> : vector<16x256xf32>
    %14 = tpu.matmul %13, %12, %cst_11 {dimension_numbers = #tpu.dot_dimension_numbers<[1], [0], [0], [1], [0, 0, 1, 1], [], []>} : vector<16x32xbf16>, vector<32x256xbf16>, vector<16x256xf32> -> vector<16x256xf32>
    %15 = vector.shape_cast %14 : vector<16x256xf32> to vector<1x16x256xf32>
    %c0_12 = arith.constant 0 : index
    %c0_13 = arith.constant 0 : index
    %c0_14 = arith.constant 0 : index
    %16 = vector.load %arg6[%c0_12, %c0_13, %c0_14] : memref<1x16x256xf32, #tpu.memory_space<vmem>>, vector<1x16x256xf32>
    tpu.vector_store %arg6[%c0_12, %c0_13, %c0_14], %15 {strides = array<i32>} : memref<1x16x256xf32, #tpu.memory_space<vmem>>, vector<1x16x256xf32>,
    return
  }
  func.func @transform_0(%arg0: i32, %arg1: i32) -> (i32, i32, i32) {
    %c0_i32 = arith.constant 0 : i32
    %c0_i32_0 = arith.constant 0 : i32
    return %arg0, %c0_i32, %arg1 : i32, i32, i32
  }
  func.func @transform_1(%arg0: i32, %arg1: i32) -> (i32, i32) {
    %c0_i32 = arith.constant 0 : i32
    %c0_i32_0 = arith.constant 0 : i32
    %c0_i32_1 = arith.constant 0 : i32
    return %c0_i32, %c0_i32_0 : i32, i32
  }
  func.func @transform_2(%arg0: i32, %arg1: i32) -> (i32, i32) {
    %c0_i32 = arith.constant 0 : i32
    %c0_i32_0 = arith.constant 0 : i32
    %c0_i32_1 = arith.constant 0 : i32
    return %c0_i32, %c0_i32_0 : i32, i32
  }
  func.func @transform_3(%arg0: i32, %arg1: i32) -> (i32, i32) {
    %c0_i32 = arith.constant 0 : i32
    %c0_i32_0 = arith.constant 0 : i32
    %c0_i32_1 = arith.constant 0 : i32
    return %c0_i32, %c0_i32_0 : i32, i32
  }
  func.func @transform_4(%arg0: i32, %arg1: i32) -> (i32, i32, i32) {
    %c0_i32 = arith.constant 0 : i32
    %c0_i32_0 = arith.constant 0 : i32
    return %arg0, %c0_i32, %arg1 : i32, i32, i32
  }
}

</mosaic_0001>

<llo_original>
// kernel: tpu_custom_call.1
$region0: #{tpu_custom_call.1}
  #allocation0 [shape = 'u32[]', space=smem, size = 0x4, offset = 0x4, fixed_abs, tag = 'smem constant byte address 0x4 - core index']
  #allocation1 [shape = 'u32[144,128]{1,0:T(1,128)}', space=vmem, size = 0x12000, scoped, tag = 'internal scratch']
  %s0 = inlined_call_operand.hbm [shape: f32[2,8,256], index: 0, kind: input, shape index: {}]
  %s1 = inlined_call_operand.vmem [shape: bf16[32,8], index: 1, kind: input, shape index: {}]
  %s2 = inlined_call_operand.vmem [shape: bf16[32,32], index: 2, kind: input, shape index: {}]
  %s3 = inlined_call_operand.vmem [shape: bf16[16,32], index: 3, kind: input, shape index: {}]
  %s4 = inlined_call_operand.hbm [shape: f32[2,16,256], index: 4, kind: output, shape index: {}]
  %s5 = sld [smem:[#allocation0]]
  $region53: #{tpu_custom_call.1} parent=0
    _
  %s7 = ssub.s32 1, %s5
  %s8 = scalar_select 0, %s7, %s5
  $region1: #{tpu_custom_call.1} parent=0
    #allocation2 [shape = 'u8[16384]{0}', space=vmem, size = 0x4000, scoped, tag = 'input window, operand 0']
    #allocation3 [shape = 's32[2]{0}', space=sflag, size = 0x8, scoped, tag = 'scoped memory for tpu_custom_call.1']
    #allocation4 [shape = 's32[2]{0}', space=sflag, size = 0x8, scoped, tag = 'scoped memory for tpu_custom_call.1']
    #allocation5 [shape = 'u8[32768]{0}', space=vmem, size = 0x8000, scoped, tag = 'output window, operand 0']
    %9 = vsyncpa [#allocation3], 0
    %s10 = scalar_lea.sflag [#allocation3], 1
    %11 = vsyncpa %s10, 0
    %12 = vsyncpa [#allocation4], 0
    %s13 = scalar_lea.sflag [#allocation4], 1
    %14 = vsyncpa %s13, 0
    loop: start=0, step=1, limit=4
    $region2: #{tpu_custom_call.1} parent=1 // loop_pre_header
      _
    $region3: #{tpu_custom_call.1} parent=1 // loop_header
      %s16 = sphi 0, %s20
      %p17 = scmp.ge.s32.totalorder %s16, 4
      %s23 = sphi 0, %s35
      %s24 = sphi 0, %s31
      %s25 = sphi 0, %s23
      %s26 = sphi 0, %s24
      %s27 = sphi 0, %s25
      %s28 = sphi 0, %s26
      %s40 = sphi 0, %s42
      %s43 = sphi 0, %s40
      %s44 = sphi 0, %s43
      %s60 = sphi 0, %s44
      %s64 = sphi 0, %s64
      %s66 = sphi 0, %s64
      %s67 = sphi 0, %s66
      %s81 = sphi 0, %s67
      %s85 = sphi 0, %s85
      %s87 = sphi 0, %s85
      %s88 = sphi 0, %s87
      %s102 = sphi 0, %s88
      %s106 = sphi 0, %s106
      %s108 = sphi 0, %s106
      %s109 = sphi 0, %s108
      %s123 = sphi 0, %s109
      %s131 = sphi 0, %s133
      %s134 = sphi 0, %s131
      %s135 = sphi 0, %s134
      %s151 = sphi 0, %s135
    $region4: #{tpu_custom_call.1} parent=1 // loop_header_branch
      %19 = sbr.rel (%p17) target = $region8
    $region5: #{tpu_custom_call.1} parent=1 // loop_body
      %s21 = ssub.s32 %s16, 1
      %s22 = ssub.s32 %s16, 2
      %s29 = sadd.s32 1, %s24
      %p30 = scmp.ge.s32.totalorder %s29, 1
      %s31 = scalar_select %p30, 0, %s29
      %s32 = sadd.s32 1, %s23
      %s33 = scalar_select %p30, %s32, %s23
      %p34 = scmp.ge.s32.totalorder %s33, 2
      %s35 = scalar_select %p34, 0, %s33
      %s36 = ssub.s32 %s23, %s35
      %s37 = ssub.s32 %s24, %s31
      %s38 = sor.u32 %s36, %s37
      %p39 = scmp.eq.s32.totalorder %s38, 0
      %s41 = sadd.s32 %s40, 1
      %s42 = scalar_select %p39, %s40, %s41
      %p45 = pneg %p39
      %p46 = scmp.eq.s32.totalorder %s16, 1
      %p47 = por %p45, %p46
      %p48 = scmp.ne.s32.totalorder %s40, %s43
      %p49 = scmp.eq.s32.totalorder %s16, 0
      %p50 = por %p48, %p49
      %p51 = scmp.ne.s32.totalorder %s40, %s43
      %p52 = scmp.eq.s32.totalorder %s21, 1
      %p53 = por %p51, %p52
      %p54 = scmp.ne.s32.totalorder %s43, %s44
      %p55 = scmp.eq.s32.totalorder %s21, 0
      %p56 = por %p54, %p55
      %p57 = scmp.ne.s32.totalorder %s43, %s44
      %p58 = scmp.eq.s32.totalorder %s22, 1
      %p59 = por %p57, %p58
      %p61 = scmp.ne.s32.totalorder %s44, %s60
      %p62 = scmp.eq.s32.totalorder %s22, 0
      %p63 = por %p61, %p62
      %s65 = sadd.s32 %s64, 1
      %p68 = scmp.eq.s32.totalorder %s16, 1
      %p69 = scmp.ne.s32.totalorder %s64, %s66
      %p70 = scmp.eq.s32.totalorder %s16, 0
      %p71 = por %p69, %p70
      %p72 = scmp.ne.s32.totalorder %s64, %s66
      %p73 = scmp.eq.s32.totalorder %s21, 1
      %p74 = por %p72, %p73
      %p75 = scmp.ne.s32.totalorder %s66, %s67
      %p76 = scmp.eq.s32.totalorder %s21, 0
      %p77 = por %p75, %p76
      %p78 = scmp.ne.s32.totalorder %s66, %s67
      %p79 = scmp.eq.s32.totalorder %s22, 1
      %p80 = por %p78, %p79
      %p82 = scmp.ne.s32.totalorder %s67, %s81
      %p83 = scmp.eq.s32.totalorder %s22, 0
      %p84 = por %p82, %p83
      %s86 = sadd.s32 %s85, 1
      %p89 = scmp.eq.s32.totalorder %s16, 1
      %p90 = scmp.ne.s32.totalorder %s85, %s87
      %p91 = scmp.eq.s32.totalorder %s16, 0
      %p92 = por %p90, %p91
      %p93 = scmp.ne.s32.totalorder %s85, %s87
      %p94 = scmp.eq.s32.totalorder %s21, 1
      %p95 = por %p93, %p94
      %p96 = scmp.ne.s32.totalorder %s87, %s88
      %p97 = scmp.eq.s32.totalorder %s21, 0
      %p98 = por %p96, %p97
      %p99 = scmp.ne.s32.totalorder %s87, %s88
      %p100 = scmp.eq.s32.totalorder %s22, 1
      %p101 = por %p99, %p100
      %p103 = scmp.ne.s32.totalorder %s88, %s102
      %p104 = scmp.eq.s32.totalorder %s22, 0
      %p105 = por %p103, %p104
      %s107 = sadd.s32 %s106, 1
      %p110 = scmp.eq.s32.totalorder %s16, 1
      %p111 = scmp.ne.s32.totalorder %s106, %s108
      %p112 = scmp.eq.s32.totalorder %s16, 0
      %p113 = por %p111, %p112
      %p114 = scmp.ne.s32.totalorder %s106, %s108
      %p115 = scmp.eq.s32.totalorder %s21, 1
      %p116 = por %p114, %p115
      %p117 = scmp.ne.s32.totalorder %s108, %s109
      %p118 = scmp.eq.s32.totalorder %s21, 0
      %p119 = por %p117, %p118
      %p120 = scmp.ne.s32.totalorder %s108, %s109
      %p121 = scmp.eq.s32.totalorder %s22, 1
      %p122 = por %p120, %p121
      %p124 = scmp.ne.s32.totalorder %s109, %s123
      %p125 = scmp.eq.s32.totalorder %s22, 0
      %p126 = por %p124, %p125
      %s127 = ssub.s32 %s23, %s35
      %s128 = ssub.s32 %s24, %s31
      %s129 = sor.u32 %s127, %s128
      %p130 = scmp.eq.s32.totalorder %s129, 0
      %s132 = sadd.s32 %s131, 1
      %s133 = scalar_select %p130, %s131, %s132
      %p136 = pneg %p130
      %p137 = scmp.eq.s32.totalorder %s16, 1
      %p138 = por %p136, %p137
      %p139 = scmp.ne.s32.totalorder %s131, %s134
      %p140 = scmp.eq.s32.totalorder %s16, 0
      %p141 = por %p139, %p140
      %p142 = scmp.ne.s32.totalorder %s131, %s134
      %p143 = scmp.eq.s32.totalorder %s21, 1
      %p144 = por %p142, %p143
      %p145 = scmp.ne.s32.totalorder %s134, %s135
      %p146 = scmp.eq.s32.totalorder %s21, 0
      %p147 = por %p145, %p146
      %p148 = scmp.ne.s32.totalorder %s134, %s135
      %p149 = scmp.eq.s32.totalorder %s22, 1
      %p150 = por %p148, %p149
      %p152 = scmp.ne.s32.totalorder %s135, %s151
      %p153 = scmp.eq.s32.totalorder %s22, 0
      %p154 = por %p152, %p153
      %p155 = scmp.le.s32.totalorder 1, %s16
      %p156 = scmp.lt.s32.totalorder %s16, 3
      %p157 = pnand %p155, %p156
      %p158 = pneg %p157
      // Predicated region
      $region9: #{tpu_custom_call.1} parent=5 // pred_check
        _
      $region10: #{tpu_custom_call.1} parent=5 // pred_check_branch
        %160 = sbr.rel (%p157) target = $region12
      $region11: #{tpu_custom_call.1} parent=5 // pred_region
        %s161 = ssub.s32 %s16, 1
        // Predicated region
        $region13: #{tpu_custom_call.1} parent=11 // pred_check
          %p162 = pneg %p77
        $region14: #{tpu_custom_call.1} parent=11 // pred_check_branch
          %164 = sbr.rel (%p162) target = $region16
        $region15: #{tpu_custom_call.1} parent=11 // pred_region
          _
        $region16: #{tpu_custom_call.1} parent=11 // pred_fallthru
          _
        // Predicated region
        $region17: #{tpu_custom_call.1} parent=11 // pred_check
          %p165 = pneg %p98
        $region18: #{tpu_custom_call.1} parent=11 // pred_check_branch
          %167 = sbr.rel (%p165) target = $region20
        $region19: #{tpu_custom_call.1} parent=11 // pred_region
          _
        $region20: #{tpu_custom_call.1} parent=11 // pred_fallthru
          _
        // Predicated region
        $region21: #{tpu_custom_call.1} parent=11 // pred_check
          %p168 = pneg %p119
        $region22: #{tpu_custom_call.1} parent=11 // pred_check_branch
          %170 = sbr.rel (%p168) target = $region24
        $region23: #{tpu_custom_call.1} parent=11 // pred_region
          _
        $region24: #{tpu_custom_call.1} parent=11 // pred_fallthru
          _
      $region12: #{tpu_custom_call.1} parent=5 // pred_fallthru
        _
      %p171 = scmp.lt.s32.totalorder %s16, 2
      // Predicated region
      $region25: #{tpu_custom_call.1} parent=5 // pred_check
        %p172 = pneg %p171
      $region26: #{tpu_custom_call.1} parent=5 // pred_check_branch
        %174 = sbr.rel (%p172) target = $region28
      $region27: #{tpu_custom_call.1} parent=5 // pred_region
        // Predicated region
        $region29: #{tpu_custom_call.1} parent=27 // pred_check
          %p175 = pneg %p50
        $region30: #{tpu_custom_call.1} parent=27 // pred_check_branch
          %177 = sbr.rel (%p175) target = $region32
        $region31: #{tpu_custom_call.1} parent=27 // pred_region
          %s178 = sand.u32 %s40, 1
          %s179 = scalar_lea.sflag [#allocation3], %s178
          %s180 = sand.u32 %s40, 1
          %s181 = smul.addr %s180, 16
          %s182 = scalar_lea.vmem [#allocation2], %s181
          %s183 = smul.u32 2, %s24
          %s185 = ssub.s32 256, 256
          %186 = vsyncadd %s179, %s185
          %s187 = smul.addr %s23, 2
          %s188 = sadd.s32 %s183, %s187
          %s189 = smul.addr %s188, 128
          %s190 = scalar_lea.hbm %s0, %s189
          %s192 = sshll.u32 %s182, 4
          %s193 = int_to_ptr.vmem [resolvable:$true] %s192
          %195 = dma.hbm_to_vmem [thread:$0]  %s190, 256, %s193, %s179
        $region32: #{tpu_custom_call.1} parent=27 // pred_fallthru
          _
      $region28: #{tpu_custom_call.1} parent=5 // pred_fallthru
        _
      %p196 = scmp.le.s32.totalorder 1, %s16
      %p197 = scmp.lt.s32.totalorder %s16, 3
      %p198 = pnand %p196, %p197
      %p199 = pneg %p198
      // Predicated region
      $region33: #{tpu_custom_call.1} parent=5 // pred_check
        _
      $region34: #{tpu_custom_call.1} parent=5 // pred_check_branch
        %201 = sbr.rel (%p198) target = $region36
      $region35: #{tpu_custom_call.1} parent=5 // pred_region
        %s202 = ssub.s32 %s16, 1
        %s203 = sand.u32 %s43, 1
        %s204 = scalar_lea.sflag [#allocation3], %s203
        %s205 = sand.u32 %s43, 1
        %s206 = smul.addr %s205, 16
        %s207 = scalar_lea.vmem [#allocation2], %s206
        // Predicated region
        $region37: #{tpu_custom_call.1} parent=35 // pred_check
          %p208 = pneg %p56
        $region38: #{tpu_custom_call.1} parent=35 // pred_check_branch
          %210 = sbr.rel (%p208) target = $region40
        $region39: #{tpu_custom_call.1} parent=35 // pred_region
          %211 = dma.done %s204, 256
        $region40: #{tpu_custom_call.1} parent=35 // pred_fallthru
          _
        %s212 = sand.u32 %s43, 1
        %s213 = scalar_lea.sflag [#allocation3], %s212
        %s214 = sand.u32 %s43, 1
        %s215 = smul.addr %s214, 16
        %s216 = scalar_lea.vmem [#allocation2], %s215
        %p217 = pneg %p56
        %p218 = pneg %p53
        %p219 = pneg %p77
        %p220 = pneg %p74
        %p221 = pneg %p98
        %p222 = pneg %p95
        %p223 = pneg %p119
        %p224 = pneg %p116
        %p225 = pneg %p147
        %p226 = pneg %p144
        %s227 = sand.u32 %s134, 1
        %s228 = scalar_lea.sflag [#allocation4], %s227
        %s229 = sand.u32 %s134, 1
        %s230 = smul.addr %s229, 32
        %s231 = scalar_lea.vmem [#allocation5], %s230
        %s232 = smul.u32 2, %s26
        %s233 = smul.u32 2, %s26
        %v235 = vld [vmem:[%s207] sm:$0xff]
        %v236 = vld [vmem:[%s207 + $0x8] sm:$0xff]
        %v237 = vpack.c.bf16 %v235, %v235
        %v238 = vpack.c.bf16 %v236, %v236
        %v239 = vld [vmem:[%s1] sm:$0xf]
        %v240 = vld [vmem:[%s1 + $0x4] sm:$0xf]
        %v241 = vld [vmem:[%s1 + $0x8] sm:$0xf]
        %v242 = vld [vmem:[%s1 + $0xc] sm:$0xf]
        %v247 = vunpack.c.l.b16 %v239
        %v248 = vunpack.c.l.b16 %v240
        %v249 = vunpack.c.l.b16 %v241
        %v250 = vunpack.c.l.b16 %v242
        %v251 = vpack.c.b16 %v248, %v247
        %v252 = vpack.c.b16 %v250, %v249
        %vm253 = vcmask 64512
        %v255 = vsel %vm253, %v251, 0
        %v258 = vsel %vm253, %v252, 0
        %vm260 = vcmask 1043456
        %v262 = vsel %vm260, %v237, 0
        %v265 = vsel %vm260, %v238, 0
        %267 = vmatprep.subr.bf16.mxu0 %v265
        %268 = vmatpush1.bf16.msra.mxu0 %v262
        %269 = vmatprep.subr.bf16.mxu0 0
        %270 = vmatpush1.bf16.msra.mxu0 0
        %271 = vmatprep.subr.bf16.mxu0 0
        %272 = vmatpush1.bf16.msra.mxu0 0
        %273 = vmatprep.subr.bf16.mxu0 0
        %274 = vmatpush1.bf16.msra.mxu0 0
        %275 = vmatprep.subr.bf16.mxu0 0
        %276 = vmatpush1.bf16.msra.mxu0 0
        %277 = vmatprep.subr.bf16.mxu0 0
        %278 = vmatpush1.bf16.msra.mxu0 0
        %279 = vmatprep.subr.bf16.mxu0 0
        %280 = vmatpush1.bf16.msra.mxu0 0
        %281 = vmatprep.subr.bf16.mxu0 0
        %282 = vmatpush1.bf16.msra.mxu0 0
        %283 = vmatprep.subr.bf16.mxu0 0
        %284 = vmatpush1.bf16.msra.mxu0 0
        %285 = vmatprep.subr.bf16.mxu0 0
        %286 = vmatpush1.bf16.msra.mxu0 0
        %287 = vmatprep.subr.bf16.mxu0 0
        %288 = vmatpush1.bf16.msra.mxu0 0
        %289 = vmatprep.subr.bf16.mxu0 0
        %290 = vmatpush1.bf16.msra.mxu0 0
        %291 = vmatprep.subr.bf16.mxu0 0
        %292 = vmatpush1.bf16.msra.mxu0 0
        %293 = vmatprep.subr.bf16.mxu0 0
        %294 = vmatpush1.bf16.msra.mxu0 0
        %295 = vmatprep.subr.bf16.mxu0 0
        %296 = vmatpush1.bf16.msra.mxu0 0
        %297 = vmatprep.subr.bf16.mxu0 0
        %298 = vmatpush1.bf16.msra.mxu0 0
        %299 = vmatprep.mubr.bf16.mxu0 0
        %300 = vmatmul.mubr.bf16.gmra.mrb[0].mxu0 %v255
        %v301 = vpop.f32.mrb[0].mxu0
        %v302 = vadd.f32 0.0, %v301
        %v303 = vpop.f32.mrb[0].mxu0
        %v304 = vadd.f32 0.0, %v303
        %v305 = vpop.f32.mrb[0].mxu0
        %v306 = vadd.f32 0.0, %v305
        %v307 = vpop.f32.mrb[0].mxu0
        %v308 = vadd.f32 0.0, %v307
        %309 = vmatprep.mubr.bf16.mxu0 0
        %310 = vmatmul.mubr.bf16.gmra.mrb[0].mxu0 %v258
        %v311 = vpop.f32.mrb[0].mxu0
        %v312 = vadd.f32 0.0, %v311
        %v313 = vpop.f32.mrb[0].mxu0
        %v314 = vadd.f32 0.0, %v313
        %v315 = vpop.f32.mrb[0].mxu0
        %v316 = vadd.f32 0.0, %v315
        %v317 = vpop.f32.mrb[0].mxu0
        %v318 = vadd.f32 0.0, %v317
        %319 = vdwg.mxu0
        %v320 = vmax.f32 %v302, 0.0
        %v321 = vmax.f32 %v304, 0.0
        %v322 = vmax.f32 %v306, 0.0
        %v323 = vmax.f32 %v308, 0.0
        %v324 = vmax.f32 %v312, 0.0
        %v325 = vmax.f32 %v314, 0.0
        %v326 = vmax.f32 %v316, 0.0
        %v327 = vmax.f32 %v318, 0.0
        %v328 = vpack.c.bf16 %v322, %v320
        %v329 = vpack.c.bf16 %v323, %v321
        %v330 = vpack.c.bf16 %v326, %v324
        %v331 = vpack.c.bf16 %v327, %v325
        %v332 = vld [vmem:[%s2] sm:$0xf]
        %v333 = vld [vmem:[%s2 + $0x4] sm:$0xf]
        %v334 = vld [vmem:[%s2 + $0x8] sm:$0xf]
        %v335 = vld [vmem:[%s2 + $0xc] sm:$0xf]
        %v340 = vunpack.c.l.b16 %v332
        %v341 = vunpack.c.l.b16 %v333
        %v342 = vunpack.c.l.b16 %v334
        %v343 = vunpack.c.l.b16 %v335
        %v344 = vpack.c.b16 %v341, %v340
        %v345 = vpack.c.b16 %v343, %v342
        %vm346 = vcmask 261120
        %v348 = vsel %vm346, %v344, 0
        %v351 = vsel %vm346, %v345, 0
        %353 = vmatprep.subr.bf16.mxu0 %v329
        %354 = vmatpush1.bf16.msra.mxu0 %v328
        %355 = vmatprep.subr.bf16.mxu0 %v331
        %356 = vmatpush1.bf16.msra.mxu0 %v330
        %357 = vmatprep.subr.bf16.mxu0 0
        %358 = vmatpush1.bf16.msra.mxu0 0
        %359 = vmatprep.subr.bf16.mxu0 0
        %360 = vmatpush1.bf16.msra.mxu0 0
        %361 = vmatprep.subr.bf16.mxu0 0
        %362 = vmatpush1.bf16.msra.mxu0 0
        %363 = vmatprep.subr.bf16.mxu0 0
        %364 = vmatpush1.bf16.msra.mxu0 0
        %365 = vmatprep.subr.bf16.mxu0 0
        %366 = vmatpush1.bf16.msra.mxu0 0
        %367 = vmatprep.subr.bf16.mxu0 0
        %368 = vmatpush1.bf16.msra.mxu0 0
        %369 = vmatprep.subr.bf16.mxu0 0
        %370 = vmatpush1.bf16.msra.mxu0 0
        %371 = vmatprep.subr.bf16.mxu0 0
        %372 = vmatpush1.bf16.msra.mxu0 0
        %373 = vmatprep.subr.bf16.mxu0 0
        %374 = vmatpush1.bf16.msra.mxu0 0
        %375 = vmatprep.subr.bf16.mxu0 0
        %376 = vmatpush1.bf16.msra.mxu0 0
        %377 = vmatprep.subr.bf16.mxu0 0
        %378 = vmatpush1.bf16.msra.mxu0 0
        %379 = vmatprep.subr.bf16.mxu0 0
        %380 = vmatpush1.bf16.msra.mxu0 0
        %381 = vmatprep.subr.bf16.mxu0 0
        %382 = vmatpush1.bf16.msra.mxu0 0
        %383 = vmatprep.subr.bf16.mxu0 0
        %384 = vmatpush1.bf16.msra.mxu0 0
        %385 = vmatprep.mubr.bf16.mxu0 0
        %386 = vmatmul.mubr.bf16.gmra.mrb[0].mxu0 %v348
        %v387 = vpop.f32.mrb[0].mxu0
        %v388 = vadd.f32 0.0, %v387
        %v389 = vpop.f32.mrb[0].mxu0
        %v390 = vadd.f32 0.0, %v389
        %v391 = vpop.f32.mrb[0].mxu0
        %v392 = vadd.f32 0.0, %v391
        %v393 = vpop.f32.mrb[0].mxu0
        %v394 = vadd.f32 0.0, %v393
        %395 = vmatprep.mubr.bf16.mxu0 0
        %396 = vmatmul.mubr.bf16.gmra.mrb[0].mxu0 %v351
        %v397 = vpop.f32.mrb[0].mxu0
        %v398 = vadd.f32 0.0, %v397
        %v399 = vpop.f32.mrb[0].mxu0
        %v400 = vadd.f32 0.0, %v399
        %v401 = vpop.f32.mrb[0].mxu0
        %v402 = vadd.f32 0.0, %v401
        %v403 = vpop.f32.mrb[0].mxu0
        %v404 = vadd.f32 0.0, %v403
        %405 = vdwg.mxu0
        %v406 = vmax.f32 %v388, 0.0
        %v407 = vmax.f32 %v390, 0.0
        %v408 = vmax.f32 %v392, 0.0
        %v409 = vmax.f32 %v394, 0.0
        %v410 = vmax.f32 %v398, 0.0
        %v411 = vmax.f32 %v400, 0.0
        %v412 = vmax.f32 %v402, 0.0
        %v413 = vmax.f32 %v404, 0.0
        %v414 = vpack.c.bf16 %v408, %v406
        %v415 = vpack.c.bf16 %v409, %v407
        %v416 = vpack.c.bf16 %v412, %v410
        %v417 = vpack.c.bf16 %v413, %v411
        %v418 = vld [vmem:[%s3] sm:$0xf]
        %v419 = vld [vmem:[%s3 + $0x4] sm:$0xf]
        %v422 = vunpack.c.l.b16 %v418
        %v423 = vunpack.c.l.b16 %v419
        %v424 = vpack.c.b16 %v423, %v422
        %v426 = vsel %vm346, %v424, 0
        %428 = vmatprep.subr.bf16.mxu0 %v415
        %429 = vmatpush1.bf16.msra.mxu0 %v414
        %430 = vmatprep.subr.bf16.mxu0 %v417
        %431 = vmatpush1.bf16.msra.mxu0 %v416
        %432 = vmatprep.subr.bf16.mxu0 0
        %433 = vmatpush1.bf16.msra.mxu0 0
        %434 = vmatprep.subr.bf16.mxu0 0
        %435 = vmatpush1.bf16.msra.mxu0 0
        %436 = vmatprep.subr.bf16.mxu0 0
        %437 = vmatpush1.bf16.msra.mxu0 0
        %438 = vmatprep.subr.bf16.mxu0 0
        %439 = vmatpush1.bf16.msra.mxu0 0
        %440 = vmatprep.subr.bf16.mxu0 0
        %441 = vmatpush1.bf16.msra.mxu0 0
        %442 = vmatprep.subr.bf16.mxu0 0
        %443 = vmatpush1.bf16.msra.mxu0 0
        %444 = vmatprep.subr.bf16.mxu0 0
        %445 = vmatpush1.bf16.msra.mxu0 0
        %446 = vmatprep.subr.bf16.mxu0 0
        %447 = vmatpush1.bf16.msra.mxu0 0
        %448 = vmatprep.subr.bf16.mxu0 0
        %449 = vmatpush1.bf16.msra.mxu0 0
        %450 = vmatprep.subr.bf16.mxu0 0
        %451 = vmatpush1.bf16.msra.mxu0 0
        %452 = vmatprep.subr.bf16.mxu0 0
        %453 = vmatpush1.bf16.msra.mxu0 0
        %454 = vmatprep.subr.bf16.mxu0 0
        %455 = vmatpush1.bf16.msra.mxu0 0
        %456 = vmatprep.subr.bf16.mxu0 0
        %457 = vmatpush1.bf16.msra.mxu0 0
        %458 = vmatprep.subr.bf16.mxu0 0
        %459 = vmatpush1.bf16.msra.mxu0 0
        %460 = vmatprep.mubr.bf16.mxu0 0
        %461 = vmatmul.mubr.bf16.gmra.mrb[0].mxu0 %v426
        %v462 = vpop.f32.mrb[0].mxu0
        %v463 = vadd.f32 0.0, %v462
        %v464 = vpop.f32.mrb[0].mxu0
        %v465 = vadd.f32 0.0, %v464
        %v466 = vpop.f32.mrb[0].mxu0
        %v467 = vadd.f32 0.0, %v466
        %v468 = vpop.f32.mrb[0].mxu0
        %v469 = vadd.f32 0.0, %v468
        %470 = vdwg.mxu0
        %471 = vst [vmem:[%s231] sm:$0xff] %v463
        %472 = vst [vmem:[%s231 + $0x8] sm:$0xff] %v465
        %473 = vst [vmem:[%s231 + $0x10] sm:$0xff] %v467
        %474 = vst [vmem:[%s231 + $0x18] sm:$0xff] %v469
        %s475 = sand.u32 %s134, 1
        %s476 = scalar_lea.sflag [#allocation4], %s475
        %s477 = sand.u32 %s134, 1
        %s478 = smul.addr %s477, 32
        %s479 = scalar_lea.vmem [#allocation5], %s478
        // Predicated region
        $region41: #{tpu_custom_call.1} parent=35 // pred_check
          %p480 = pneg %p144
        $region42: #{tpu_custom_call.1} parent=35 // pred_check_branch
          %482 = sbr.rel (%p480) target = $region44
        $region43: #{tpu_custom_call.1} parent=35 // pred_region
          %s483 = smul.u32 2, %s26
          %s485 = ssub.s32 512, 512
          %486 = vsyncadd %s476, %s485
          %s487 = smul.addr %s25, 4
          %s488 = sadd.s32 %s483, %s487
          %s489 = smul.addr %s488, 128
          %s490 = scalar_lea.hbm %s4, %s489
          %s491 = sshll.u32 %s479, 4
          %s492 = int_to_ptr.vmem [resolvable:$true] %s491
          %497 = dma.vmem_to_hbm [thread:$0]  %s492, 512, %s490, %s476, 256, 256, 16
        $region44: #{tpu_custom_call.1} parent=35 // pred_fallthru
          _
      $region36: #{tpu_custom_call.1} parent=5 // pred_fallthru
        _
      %p498 = scmp.le.s32.totalorder 2, %s16
      // Predicated region
      $region45: #{tpu_custom_call.1} parent=5 // pred_check
        %p499 = pneg %p498
      $region46: #{tpu_custom_call.1} parent=5 // pred_check_branch
        %501 = sbr.rel (%p499) target = $region48
      $region47: #{tpu_custom_call.1} parent=5 // pred_region
        %s502 = ssub.s32 %s16, 2
        // Predicated region
        $region49: #{tpu_custom_call.1} parent=47 // pred_check
          %p503 = pneg %p150
        $region50: #{tpu_custom_call.1} parent=47 // pred_check_branch
          %505 = sbr.rel (%p503) target = $region52
        $region51: #{tpu_custom_call.1} parent=47 // pred_region
          %s506 = sand.u32 %s135, 1
          %s507 = scalar_lea.sflag [#allocation4], %s506
          %s508 = sand.u32 %s135, 1
          %s509 = smul.addr %s508, 32
          %s510 = scalar_lea.vmem [#allocation5], %s509
          %511 = dma.done %s507, 512
        $region52: #{tpu_custom_call.1} parent=47 // pred_fallthru
          _
      $region48: #{tpu_custom_call.1} parent=5 // pred_fallthru
        _
    $region6: #{tpu_custom_call.1} parent=1 // loop_footer
      %s20 = sadd.s32 1, %s16
    $region7: #{tpu_custom_call.1} parent=1 // loop_footer_branch
      %15 = sbr.rel target = $region3
    $region8: #{tpu_custom_call.1} parent=1 // loop_exit
      _
    %512 = vsyncpa [#allocation3], 1
    %s513 = scalar_lea.sflag [#allocation3], 1
    %514 = vsyncpa %s513, 1
    %515 = vsyncpa [#allocation4], 1
    %s516 = scalar_lea.sflag [#allocation4], 1
    %517 = vsyncpa %s516, 1

</llo_original>
